<compile_context>
chip_gen: v7x
topology: tpu7x:2x2x1
jax: 0.10.0
libtpu: 0.0.40
codegen_flags: <defaults>
</compile_context>

<pallas_src>
import functools

import jax
import jax.numpy as jnp
from jax.experimental import pallas as pl
from jax.experimental.pallas import tpu as pltpu


def _round_up(x, m):
    return (x + m - 1) // m * m


def _vmem_capacity_bytes():
    """Physical VMEM of the local TPU generation (fallback: v7x's 64 MiB)."""
    try:
        return int(pltpu.get_tpu_info().vmem_capacity_bytes)
    except Exception:  # older jax / attribute rename: be conservative (v7x)
        return 64 * 1024 * 1024


def _strip_bytes(r, *, Wp, Wo, Cin_p, Cout, KH, KW, in_itemsize, out_itemsize):
    """Estimated per-step VMEM footprint for an output strip of `r` rows."""
    Lx = (r + KH - 1) * Wp + (KW - 1)  # input strip incl. row/col halo
    L = r * Wp                         # padded-pitch strip length
    return (2 * Cin_p * Lx * in_itemsize                 # input strip (double-buffered)
            + 2 * Cout * r * Wo * out_itemsize           # output strip (double-buffered)
            + 2 * KH * Cout * KW * Cin_p * in_itemsize   # resident weights (x2 bufs)
            + 2 * Cout * 128 * 4                         # shift, lane-padded (x2 bufs)
            + KW * Cin_p * L * in_itemsize               # per-kh im2col temporary
            + Cout * L * 4)                              # f32 accumulator / epilogue


def _choose_strip_rows(N, Ho, Wo, Wp, Cin_p, Cout, KH, KW,
                       in_itemsize, out_itemsize, budget_bytes):
    """Largest output-row strip whose VMEM estimate fits `budget_bytes`.

    Valid candidates keep the output block's lane extent either a multiple of
    128 (unmasked dense stores) or the full row extent (single strip), so the
    (8, 128) BlockSpec constraint is always satisfied.  Prefers a grid with at
    least 2 total steps so both v7x TensorCores are fed.
    """
    est = functools.partial(_strip_bytes, Wp=Wp, Wo=Wo, Cin_p=Cin_p, Cout=Cout,
                            KH=KH, KW=KW, in_itemsize=in_itemsize,
                            out_itemsize=out_itemsize)
    aligned = [d for d in range(1, Ho + 1)
               if Ho % d == 0 and (d * Wo) % 128 == 0]
    cands = sorted(set(aligned + [Ho]), reverse=True)
    fitting = [r for r in cands if est(r) <= budget_bytes]
    if not fitting:
        # Best effort: smallest legal strip (may still exceed the budget for
        # extreme shapes; vmem_limit_bytes is raised to match in the caller).
        return min(cands)
    for r in fitting:                       # descending: biggest first
        if N * (Ho // r) >= 2:              # keep >= 2 grid steps (v7x megacore)
            return r
    return fitting[0]


def _conv_bn_relu_kernel(x_ref, w_ref, shift_ref, o_ref, *,
                         strip_rows, Wp, Wo, KH, KW, relu):
    """One grid step = one (batch element, output-row strip).

    x_ref    : (1, 1, Cin_p, Lx)        input strip (incl. halo), rows flattened
                                        at pitch Wp onto the lane axis
    w_ref    : (KH, Cout, KW*Cin_p)     BN-scale-folded weights
    shift_ref: (Cout, 1)                folded BN shift (f32)
    o_ref    : (1, Cout, strip_rows*Wo) lane-dense output strip
    """
    L = strip_rows * Wp
    xs = x_ref[0, 0]                                   # (Cin_p, Lx)

    # Accumulate over kh: KH matmuls of contraction depth KW*Cin_p.  Each
    # per-kh im2col piece is a sublane-aligned concat of KW lane-shifted
    # static slices -- ~KH x less copy traffic / VMEM than materializing one
    # (KH*KW*Cin_p, L) column buffer every step.
    acc = None
    for kh in range(KH):
        base = kh * Wp
        if KW > 1:
            col = jnp.concatenate(
                [xs[:, base + kw: base + kw + L] for kw in range(KW)], axis=0)
        else:
            col = xs[:, base: base + L]
        part = jnp.dot(w_ref[kh], col, preferred_element_type=jnp.float32)
        acc = part if acc is None else acc + part

    y = acc + shift_ref[...]                           # BatchNorm (eval) shift
    if relu:
        y = jnp.maximum(y, 0.0)

    # Compact padded-pitch rows (Wp) to dense output rows (Wo) in vregs, then
    # issue ONE dense block store (strip_rows*Wo is a multiple of 128 or the
    # full row extent) -- no per-row unaligned masked stores.
    if Wp != Wo:
        y = jnp.concatenate([y[:, r * Wp: r * Wp + Wo]
                             for r in range(strip_rows)], axis=1)
    o_ref[0] = y.astype(o_ref.dtype)


def basic_conv_forward(x, weight, gamma, beta, running_mean, running_var, *,
                       stride=1, padding=0, dilation=1, groups=1,
                       eps=1e-5, bias=None, relu=True, bn=True,
                       compute_dtype=jnp.bfloat16, out_dtype=None,
                       vmem_budget_bytes=None):
    """BasicConv forward: Conv2d -> BatchNorm2d(eval) -> ReLU.

    x      : (N, Cin, H, W)       NCHW (PyTorch convention)
    weight : (Cout, Cin, KH, KW)  OIHW (PyTorch Conv2d weight)
    returns: (N, Cout, Ho, Wo)    NCHW, dtype `out_dtype` (default: x.dtype)

    compute_dtype=bfloat16 (default) halves operand DMA/VMEM bytes and feeds
    the v6e/v7x bf16 MXU; accumulation stays f32.  Use float32 for exactness.
    """
    # TODO(synk): stride>1 / dilation>1 / groups>1 BasicConv configurations are
    # not implemented in this kernel (the demo instantiation uses 1/1/1).
    assert stride == 1 and dilation == 1 and groups == 1

    N, Cin, H, W = x.shape
    Cout, Cin_w, KH, KW = weight.shape
    assert Cin_w == Cin

    Hp, Wp = H + 2 * padding, W + 2 * padding
    Ho, Wo = Hp - KH + 1, Wp - KW + 1
    assert Ho > 0 and Wo > 0

    out_dtype = x.dtype if out_dtype is None else out_dtype
    in_itemsize = jnp.dtype(compute_dtype).itemsize
    out_itemsize = jnp.dtype(out_dtype).itemsize

    # Pad channels to a full packed sublane tile (8 for f32, 16 for bf16,
    # 32 for 8-bit) so every im2col piece stays tile aligned (no relayouts).
    Cin_p = _round_up(Cin, 8 * (4 // in_itemsize))

    # ---- VMEM-budget-aware strip selection ---------------------------------
    vmem_cap = _vmem_capacity_bytes()
    budget = vmem_budget_bytes if vmem_budget_bytes is not None else vmem_cap // 2
    strip_rows = _choose_strip_rows(N, Ho, Wo, Wp, Cin_p, Cout, KH, KW,
                                    in_itemsize, out_itemsize, budget)
    n_strips = Ho // strip_rows
    Lx = (strip_rows + KH - 1) * Wp + (KW - 1)
    L = strip_rows * Wp
    est_bytes = _strip_bytes(strip_rows, Wp=Wp, Wo=Wo, Cin_p=Cin_p, Cout=Cout,
                             KH=KH, KW=KW, in_itemsize=in_itemsize,
                             out_itemsize=out_itemsize)
    vmem_limit = int(min(0.9 * vmem_cap,
                         max(32 * 1024 * 1024, 2 * est_bytes)))

    # ---- cheap, layout-only glue (no NCHW<->NHWC transposes) ---------------
    # Spatial zero-pad (+1 slack row when KW>1 so the last tap's flattened
    # window stays in bounds), flatten H,W onto one lane axis (contiguous ->
    # free), then restripe into per-strip blocks that already include the
    # (KH-1)-row halo.  The restripe is a one-time XLA copy (~input size) that
    # keeps the kernel-side input BlockSpec a plain Blocked block.
    extra_row = 1 if KW > 1 else 0
    x_pad = jnp.pad(x, ((0, 0), (0, Cin_p - Cin),
                        (padding, padding + extra_row), (padding, padding)))
    x_flat = x_pad.reshape(N, Cin_p, (Hp + extra_row) * Wp).astype(compute_dtype)
    x_strips = jnp.stack([x_flat[:, :, s * L: s * L + Lx]
                          for s in range(n_strips)], axis=1)  # (N, S, Cin_p, Lx)

    # Fold BatchNorm (eval / running stats) into a per-Cout scale (-> weights)
    # and a shift applied in the kernel epilogue.
    if bn:
        inv_std = 1.0 / jnp.sqrt(running_var.astype(jnp.float32) + eps)
        scale = gamma.astype(jnp.float32) * inv_std
        shift = beta.astype(jnp.float32) - running_mean.astype(jnp.float32) * scale
        if bias is not None:
            shift = shift + bias.astype(jnp.float32) * scale
    else:
        scale = jnp.ones((Cout,), jnp.float32)
        shift = (bias.astype(jnp.float32) if bias is not None
                 else jnp.zeros((Cout,), jnp.float32))

    # (Cout, Cin, KH, KW) -> (KH, Cout, KW*Cin_p); BN scale folded in.
    w_p = jnp.pad(weight, ((0, 0), (0, Cin_p - Cin), (0, 0), (0, 0)))
    w_mat = (jnp.transpose(w_p, (2, 0, 3, 1)).reshape(KH, Cout, KW * Cin_p)
             * scale[None, :, None]).astype(compute_dtype)
    shift = shift.reshape(Cout, 1).astype(jnp.float32)

    kernel = functools.partial(_conv_bn_relu_kernel, strip_rows=strip_rows,
                               Wp=Wp, Wo=Wo, KH=KH, KW=KW, relu=relu)

    cost = pl.CostEstimate(
        flops=2 * N * Ho * Wo * Cout * KH * KW * Cin_p,
        transcendentals=0,
        bytes_accessed=(x_strips.size * in_itemsize
                        + w_mat.size * in_itemsize
                        + shift.size * 4
                        + N * Cout * Ho * Wo * out_itemsize))

    out_flat = pl.pallas_call(
        kernel,
        out_shape=jax.ShapeDtypeStruct((N, Cout, Ho * Wo), out_dtype),
        grid=(N, n_strips),
        in_specs=[
            # Per-(batch, strip) input block incl. halo: O(strip) VMEM,
            # pipelined strip-by-strip.
            pl.BlockSpec((1, 1, Cin_p, Lx), lambda n, s: (n, s, 0, 0)),
            # Weights / shift: constant index map -> DMA'd once, resident.
            # TODO(synk): single-buffer these via pipeline_mode=pl.Buffered(1)
            # once that path is reliable, to halve their VMEM at large Cout*K.
            pl.BlockSpec((KH, Cout, KW * Cin_p), lambda n, s: (0, 0, 0)),
            pl.BlockSpec((Cout, 1), lambda n, s: (0, 0)),
        ],
        out_specs=pl.BlockSpec((1, Cout, strip_rows * Wo),
                               lambda n, s: (n, 0, s)),
        compiler_params=pltpu.CompilerParams(
            dimension_semantics=("parallel", "parallel"),
            vmem_limit_bytes=vmem_limit),
        cost_estimate=cost,
    )(x_strips, w_mat, shift)

    # Free reshape back to NCHW (trailing dims are contiguous).
    return out_flat.reshape(N, Cout, Ho, Wo)


def _reference(x_nchw, w_oihw, gamma, beta, running_mean, running_var,
               *, padding=1, eps=1e-5):
    """Pure-JAX reference (lax conv) for correctness check."""
    y = jax.lax.conv_general_dilated(
        x_nchw, w_oihw,
        window_strides=(1, 1),
        padding=[(padding, padding), (padding, padding)],
        dimension_numbers=("NCHW", "OIHW", "NCHW"))
    scale = (gamma / jnp.sqrt(running_var + eps)).reshape(1, -1, 1, 1)
    shift = (beta - running_mean * gamma / jnp.sqrt(running_var + eps)
             ).reshape(1, -1, 1, 1)
    return jnp.maximum(y * scale + shift, 0.0)


if __name__ == "__main__":
    # BasicConv(in_planes=4, out_planes=8, kernel_size=3, stride=1, padding=1)
    N, Cin, H, W = 2, 4, 16, 16
    Cout, KH, KW = 8, 3, 3
    padding = 1

    key = jax.random.PRNGKey(0)
    k_x, k_w = jax.random.split(key)
    x = jax.random.normal(k_x, (N, Cin, H, W), dtype=jnp.float32)
    # Conv2d weight, bias=False
    w = jax.random.normal(k_w, (Cout, Cin, KH, KW), dtype=jnp.float32) * 0.1
    # Deterministic BatchNorm2d parameters / running stats (eval mode).
    gamma = 1.0 + 0.05 * jnp.arange(Cout, dtype=jnp.float32)
    beta = 0.01 * jnp.arange(Cout, dtype=jnp.float32)
    running_mean = 0.02 * jnp.arange(Cout, dtype=jnp.float32)
    running_var = 1.0 + 0.1 * jnp.arange(Cout, dtype=jnp.float32)

    ref = _reference(x, w, gamma, beta, running_mean, running_var,
                     padding=padding)

    # 1) f32 operands, default VMEM budget (single strip at this tiny shape).
    out = basic_conv_forward(x, w, gamma, beta, running_mean, running_var,
                             padding=padding, compute_dtype=jnp.float32)
    out = jax.block_until_ready(out)
    assert out.shape == (N, Cout, H, W)
    assert jnp.allclose(out, ref, atol=1e-4, rtol=1e-4), "f32 mismatch vs reference"

    # 2) f32 operands, tiny VMEM budget -> exercises the multi-strip (halo) path.
    out_s = basic_conv_forward(x, w, gamma, beta, running_mean, running_var,
                               padding=padding, compute_dtype=jnp.float32,
                               vmem_budget_bytes=64 * 1024)
    out_s = jax.block_until_ready(out_s)
    assert jnp.allclose(out_s, ref, atol=1e-4, rtol=1e-4), "strip mismatch vs reference"

    # 3) default bf16 operands (f32 accumulation): looser tolerance.
    out_bf = basic_conv_forward(x, w, gamma, beta, running_mean, running_var,
                                padding=padding)
    out_bf = jax.block_until_ready(out_bf)
    assert jnp.allclose(out_bf, ref, atol=1e-1, rtol=1e-1), "bf16 mismatch vs reference"

    print("KERNEL_OK")
</pallas_src>

<mosaic_0001>
module attributes {stable_mosaic.version = 11 : i64} {
  func.func @_conv_bn_relu_kernel(%arg0: i32, %arg1: i32, %arg2: memref<1x1x8x326xf32, #tpu.memory_space<vmem>>, %arg3: memref<3x8x24xf32, #tpu.memory_space<vmem>>, %arg4: memref<8x1xf32, #tpu.memory_space<vmem>>, %arg5: memref<1x8x256xf32, #tpu.memory_space<vmem>>) attributes {dimension_semantics = [#tpu.dimension_semantics<parallel>, #tpu.dimension_semantics<parallel>], iteration_bounds = array<i64: 2, 1>, scalar_prefetch = 0 : i64, scratch_operands = 0 : i64, tpu.core_type = #tpu.core_type<tc>, window_params = [{transform_indices = @transform_0, window_bounds = array<i64: 1, 1, 8, 326>}, {pipeline_mode = #tpu.pipeline_mode<synchronous>, transform_indices = @transform_1, window_bounds = array<i64: 3, 8, 24>}, {pipeline_mode = #tpu.pipeline_mode<synchronous>, transform_indices = @transform_2, window_bounds = array<i64: 8, 1>}, {transform_indices = @transform_3, window_bounds = array<i64: 1, 8, 256>}]} {
    %c0 = arith.constant 0 : index
    %c0_0 = arith.constant 0 : index
    %c0_1 = arith.constant 0 : index
    %c0_2 = arith.constant 0 : index
    %0 = vector.load %arg2[%c0, %c0_0, %c0_1, %c0_2] : memref<1x1x8x326xf32, #tpu.memory_space<vmem>>, vector<1x1x8x326xf32>
    %1 = vector.shape_cast %0 : vector<1x1x8x326xf32> to vector<8x326xf32>
    %2 = vector.extract_strided_slice %1 {offsets = [0, 0], sizes = [8, 288], strides = [1, 1]} : vector<8x326xf32> to vector<8x288xf32>
    %3 = vector.extract_strided_slice %1 {offsets = [0, 1], sizes = [8, 288], strides = [1, 1]} : vector<8x326xf32> to vector<8x288xf32>
    %4 = vector.extract_strided_slice %1 {offsets = [0, 2], sizes = [8, 288], strides = [1, 1]} : vector<8x326xf32> to vector<8x288xf32>
    %5 = tpu.concatenate %2, %3, %4 in 0 : vector<8x288xf32>, vector<8x288xf32>, vector<8x288xf32> -> vector<24x288xf32>
    %c0_3 = arith.constant 0 : index
    %c0_4 = arith.constant 0 : index
    %c0_5 = arith.constant 0 : index
    %6 = vector.load %arg3[%c0_3, %c0_4, %c0_5] : memref<3x8x24xf32, #tpu.memory_space<vmem>>, vector<1x8x24xf32>
    %7 = vector.shape_cast %6 : vector<1x8x24xf32> to vector<8x24xf32>
    %cst = arith.constant dense<0.000000e+00> : vector<8x288xf32>
    %8 = tpu.matmul %7, %5, %cst {dimension_numbers = #tpu.dot_dimension_numbers<[1], [0], [0], [1], [0, 0, 1, 1], [], []>} : vector<8x24xf32>, vector<24x288xf32>, vector<8x288xf32> -> vector<8x288xf32>
    %9 = vector.extract_strided_slice %1 {offsets = [0, 18], sizes = [8, 288], strides = [1, 1]} : vector<8x326xf32> to vector<8x288xf32>
    %10 = vector.extract_strided_slice %1 {offsets = [0, 19], sizes = [8, 288], strides = [1, 1]} : vector<8x326xf32> to vector<8x288xf32>
    %11 = vector.extract_strided_slice %1 {offsets = [0, 20], sizes = [8, 288], strides = [1, 1]} : vector<8x326xf32> to vector<8x288xf32>
    %12 = tpu.concatenate %9, %10, %11 in 0 : vector<8x288xf32>, vector<8x288xf32>, vector<8x288xf32> -> vector<24x288xf32>
    %c1 = arith.constant 1 : index
    %c0_6 = arith.constant 0 : index
    %c0_7 = arith.constant 0 : index
    %13 = vector.load %arg3[%c1, %c0_6, %c0_7] : memref<3x8x24xf32, #tpu.memory_space<vmem>>, vector<1x8x24xf32>
    %14 = vector.shape_cast %13 : vector<1x8x24xf32> to vector<8x24xf32>
    %cst_8 = arith.constant dense<0.000000e+00> : vector<8x288xf32>
    %15 = tpu.matmul %14, %12, %cst_8 {dimension_numbers = #tpu.dot_dimension_numbers<[1], [0], [0], [1], [0, 0, 1, 1], [], []>} : vector<8x24xf32>, vector<24x288xf32>, vector<8x288xf32> -> vector<8x288xf32>
    %16 = arith.addf %8, %15 : vector<8x288xf32>
    %17 = vector.extract_strided_slice %1 {offsets = [0, 36], sizes = [8, 288], strides = [1, 1]} : vector<8x326xf32> to vector<8x288xf32>
    %18 = vector.extract_strided_slice %1 {offsets = [0, 37], sizes = [8, 288], strides = [1, 1]} : vector<8x326xf32> to vector<8x288xf32>
    %19 = vector.extract_strided_slice %1 {offsets = [0, 38], sizes = [8, 288], strides = [1, 1]} : vector<8x326xf32> to vector<8x288xf32>
    %20 = tpu.concatenate %17, %18, %19 in 0 : vector<8x288xf32>, vector<8x288xf32>, vector<8x288xf32> -> vector<24x288xf32>
    %c2 = arith.constant 2 : index
    %c0_9 = arith.constant 0 : index
    %c0_10 = arith.constant 0 : index
    %21 = vector.load %arg3[%c2, %c0_9, %c0_10] : memref<3x8x24xf32, #tpu.memory_space<vmem>>, vector<1x8x24xf32>
    %22 = vector.shape_cast %21 : vector<1x8x24xf32> to vector<8x24xf32>
    %cst_11 = arith.constant dense<0.000000e+00> : vector<8x288xf32>
    %23 = tpu.matmul %22, %20, %cst_11 {dimension_numbers = #tpu.dot_dimension_numbers<[1], [0], [0], [1], [0, 0, 1, 1], [], []>} : vector<8x24xf32>, vector<24x288xf32>, vector<8x288xf32> -> vector<8x288xf32>
    %24 = arith.addf %16, %23 : vector<8x288xf32>
    %c0_12 = arith.constant 0 : index
    %c0_13 = arith.constant 0 : index
    %25 = vector.load %arg4[%c0_12, %c0_13] : memref<8x1xf32, #tpu.memory_space<vmem>>, vector<8x1xf32>
    %26 = vector.broadcast %25 : vector<8x1xf32> to vector<8x288xf32>
    %27 = arith.addf %24, %26 : vector<8x288xf32>
    %cst_14 = arith.constant 0.000000e+00 : f32
    %28 = vector.broadcast %cst_14 : f32 to vector<8x288xf32>
    %29 = arith.maximumf %27, %28 : vector<8x288xf32>
    %30 = vector.extract_strided_slice %29 {offsets = [0, 0], sizes = [8, 16], strides = [1, 1]} : vector<8x288xf32> to vector<8x16xf32>
    %31 = vector.extract_strided_slice %29 {offsets = [0, 18], sizes = [8, 16], strides = [1, 1]} : vector<8x288xf32> to vector<8x16xf32>
    %32 = vector.extract_strided_slice %29 {offsets = [0, 36], sizes = [8, 16], strides = [1, 1]} : vector<8x288xf32> to vector<8x16xf32>
    %33 = vector.extract_strided_slice %29 {offsets = [0, 54], sizes = [8, 16], strides = [1, 1]} : vector<8x288xf32> to vector<8x16xf32>
    %34 = vector.extract_strided_slice %29 {offsets = [0, 72], sizes = [8, 16], strides = [1, 1]} : vector<8x288xf32> to vector<8x16xf32>
    %35 = vector.extract_strided_slice %29 {offsets = [0, 90], sizes = [8, 16], strides = [1, 1]} : vector<8x288xf32> to vector<8x16xf32>
    %36 = vector.extract_strided_slice %29 {offsets = [0, 108], sizes = [8, 16], strides = [1, 1]} : vector<8x288xf32> to vector<8x16xf32>
    %37 = vector.extract_strided_slice %29 {offsets = [0, 126], sizes = [8, 16], strides = [1, 1]} : vector<8x288xf32> to vector<8x16xf32>
    %38 = vector.extract_strided_slice %29 {offsets = [0, 144], sizes = [8, 16], strides = [1, 1]} : vector<8x288xf32> to vector<8x16xf32>
    %39 = vector.extract_strided_slice %29 {offsets = [0, 162], sizes = [8, 16], strides = [1, 1]} : vector<8x288xf32> to vector<8x16xf32>
    %40 = vector.extract_strided_slice %29 {offsets = [0, 180], sizes = [8, 16], strides = [1, 1]} : vector<8x288xf32> to vector<8x16xf32>
    %41 = vector.extract_strided_slice %29 {offsets = [0, 198], sizes = [8, 16], strides = [1, 1]} : vector<8x288xf32> to vector<8x16xf32>
    %42 = vector.extract_strided_slice %29 {offsets = [0, 216], sizes = [8, 16], strides = [1, 1]} : vector<8x288xf32> to vector<8x16xf32>
    %43 = vector.extract_strided_slice %29 {offsets = [0, 234], sizes = [8, 16], strides = [1, 1]} : vector<8x288xf32> to vector<8x16xf32>
    %44 = vector.extract_strided_slice %29 {offsets = [0, 252], sizes = [8, 16], strides = [1, 1]} : vector<8x288xf32> to vector<8x16xf32>
    %45 = vector.extract_strided_slice %29 {offsets = [0, 270], sizes = [8, 16], strides = [1, 1]} : vector<8x288xf32> to vector<8x16xf32>
    %46 = tpu.concatenate %30, %31, %32, %33, %34, %35, %36, %37, %38, %39, %40, %41, %42, %43, %44, %45 in 1 : vector<8x16xf32>, vector<8x16xf32>, vector<8x16xf32>, vector<8x16xf32>, vector<8x16xf32>, vector<8x16xf32>, vector<8x16xf32>, vector<8x16xf32>, vector<8x16xf32>, vector<8x16xf32>, vector<8x16xf32>, vector<8x16xf32>, vector<8x16xf32>, vector<8x16xf32>, vector<8x16xf32>, vector<8x16xf32> -> vector<8x256xf32>
    %c0_15 = arith.constant 0 : index
    %c0_16 = arith.constant 0 : index
    %c0_17 = arith.constant 0 : index
    %47 = vector.load %arg5[%c0_15, %c0_16, %c0_17] : memref<1x8x256xf32, #tpu.memory_space<vmem>>, vector<1x8x256xf32>
    %48 = vector.shape_cast %47 : vector<1x8x256xf32> to vector<8x256xf32>
    %49 = vector.shape_cast %46 : vector<8x256xf32> to vector<1x8x256xf32>
    tpu.vector_store %arg5[%c0_15, %c0_16, %c0_17], %49 {strides = array<i32>} : memref<1x8x256xf32, #tpu.memory_space<vmem>>, vector<1x8x256xf32>,
    return
  }
  func.func @transform_0(%arg0: i32, %arg1: i32) -> (i32, i32, i32, i32) {
    %c0_i32 = arith.constant 0 : i32
    %c0_i32_0 = arith.constant 0 : i32
    %c0_i32_1 = arith.constant 0 : i32
    return %arg0, %arg1, %c0_i32, %c0_i32_0 : i32, i32, i32, i32
  }
  func.func @transform_1(%arg0: i32, %arg1: i32) -> (i32, i32, i32) {
    %c0_i32 = arith.constant 0 : i32
    %c0_i32_0 = arith.constant 0 : i32
    %c0_i32_1 = arith.constant 0 : i32
    %c0_i32_2 = arith.constant 0 : i32
    return %c0_i32, %c0_i32_0, %c0_i32_1 : i32, i32, i32
  }
  func.func @transform_2(%arg0: i32, %arg1: i32) -> (i32, i32) {
    %c0_i32 = arith.constant 0 : i32
    %c0_i32_0 = arith.constant 0 : i32
    %c0_i32_1 = arith.constant 0 : i32
    return %c0_i32, %c0_i32_0 : i32, i32
  }
  func.func @transform_3(%arg0: i32, %arg1: i32) -> (i32, i32, i32) {
    %c0_i32 = arith.constant 0 : i32
    %c0_i32_0 = arith.constant 0 : i32
    return %arg0, %c0_i32, %arg1 : i32, i32, i32
  }
}

</mosaic_0001>

<llo_original>
// kernel: tpu_custom_call.1
$region0: #{tpu_custom_call.1}
  #allocation0 [shape = 'u32[]', space=smem, size = 0x4, offset = 0x4, fixed_abs, tag = 'smem constant byte address 0x4 - core index']
  #allocation1 [shape = 'u32[144,128]{1,0:T(1,128)}', space=vmem, size = 0x12000, scoped, tag = 'internal scratch']
  %s0 = inlined_call_operand.hbm [shape: f32[2,1,8,326], index: 0, kind: input, shape index: {}]
  %s1 = inlined_call_operand.hbm [shape: f32[3,8,24], index: 1, kind: input, shape index: {}]
  %s2 = inlined_call_operand.vmem [shape: f32[8,1], index: 2, kind: input, shape index: {}]
  %s3 = inlined_call_operand.hbm [shape: f32[2,8,256], index: 3, kind: output, shape index: {}]
  %s4 = sld [smem:[#allocation0]]
  $region53: #{tpu_custom_call.1} parent=0
    _
  %s6 = ssub.s32 1, %s4
  %s7 = scalar_select 0, %s6, %s4
  $region1: #{tpu_custom_call.1} parent=0
    #allocation2 [shape = 'u8[24576]{0}', space=vmem, size = 0x6000, scoped, tag = 'input window, operand 0']
    #allocation3 [shape = 's32[2]{0}', space=sflag, size = 0x8, scoped, tag = 'scoped memory for tpu_custom_call.1']
    #allocation4 [shape = 's32[2]{0}', space=sflag, size = 0x8, scoped, tag = 'scoped memory for tpu_custom_call.1']
    #allocation5 [shape = 'u8[12288]{0}', space=vmem, size = 0x3000, scoped, tag = 'input window, operand 1, single buffered']
    #allocation6 [shape = 's32[1]{0}', space=sflag, size = 0x4, scoped, tag = 'scoped memory for tpu_custom_call.1']
    #allocation7 [shape = 'u8[16384]{0}', space=vmem, size = 0x4000, scoped, tag = 'output window, operand 0']
    %8 = vsyncpa [#allocation3], 0
    %s9 = scalar_lea.sflag [#allocation3], 1
    %10 = vsyncpa %s9, 0
    %11 = vsyncpa [#allocation6], 0
    %12 = vsyncpa [#allocation4], 0
    %s13 = scalar_lea.sflag [#allocation4], 1
    %14 = vsyncpa %s13, 0
    loop: start=0, step=1, limit=4
    $region2: #{tpu_custom_call.1} parent=1 // loop_pre_header
      _
    $region3: #{tpu_custom_call.1} parent=1 // loop_header
      %s16 = sphi 0, %s20
      %p17 = scmp.ge.s32.totalorder %s16, 4
      %s23 = sphi 0, %s35
      %s24 = sphi 0, %s31
      %s25 = sphi 0, %s23
      %s26 = sphi 0, %s24
      %s27 = sphi 0, %s25
      %s28 = sphi 0, %s26
      %s40 = sphi 0, %s42
      %s43 = sphi 0, %s40
      %s44 = sphi 0, %s43
      %s60 = sphi 0, %s44
      %s64 = sphi 0, %s64
      %s66 = sphi 0, %s64
      %s67 = sphi 0, %s66
      %s81 = sphi 0, %s67
      %s85 = sphi 0, %s85
      %s87 = sphi 0, %s85
      %s88 = sphi 0, %s87
      %s102 = sphi 0, %s88
      %s110 = sphi 0, %s112
      %s113 = sphi 0, %s110
      %s114 = sphi 0, %s113
      %s130 = sphi 0, %s114
    $region4: #{tpu_custom_call.1} parent=1 // loop_header_branch
      %19 = sbr.rel (%p17) target = $region8
    $region5: #{tpu_custom_call.1} parent=1 // loop_body
      %s21 = ssub.s32 %s16, 1
      %s22 = ssub.s32 %s16, 2
      %s29 = sadd.s32 1, %s24
      %p30 = scmp.ge.s32.totalorder %s29, 1
      %s31 = scalar_select %p30, 0, %s29
      %s32 = sadd.s32 1, %s23
      %s33 = scalar_select %p30, %s32, %s23
      %p34 = scmp.ge.s32.totalorder %s33, 2
      %s35 = scalar_select %p34, 0, %s33
      %s36 = ssub.s32 %s23, %s35
      %s37 = ssub.s32 %s24, %s31
      %s38 = sor.u32 %s36, %s37
      %p39 = scmp.eq.s32.totalorder %s38, 0
      %s41 = sadd.s32 %s40, 1
      %s42 = scalar_select %p39, %s40, %s41
      %p45 = pneg %p39
      %p46 = scmp.eq.s32.totalorder %s16, 1
      %p47 = por %p45, %p46
      %p48 = scmp.ne.s32.totalorder %s40, %s43
      %p49 = scmp.eq.s32.totalorder %s16, 0
      %p50 = por %p48, %p49
      %p51 = scmp.ne.s32.totalorder %s40, %s43
      %p52 = scmp.eq.s32.totalorder %s21, 1
      %p53 = por %p51, %p52
      %p54 = scmp.ne.s32.totalorder %s43, %s44
      %p55 = scmp.eq.s32.totalorder %s21, 0
      %p56 = por %p54, %p55
      %p57 = scmp.ne.s32.totalorder %s43, %s44
      %p58 = scmp.eq.s32.totalorder %s22, 1
      %p59 = por %p57, %p58
      %p61 = scmp.ne.s32.totalorder %s44, %s60
      %p62 = scmp.eq.s32.totalorder %s22, 0
      %p63 = por %p61, %p62
      %s65 = sadd.s32 %s64, 1
      %p68 = scmp.eq.s32.totalorder %s16, 1
      %p69 = scmp.ne.s32.totalorder %s64, %s66
      %p70 = scmp.eq.s32.totalorder %s16, 0
      %p71 = por %p69, %p70
      %p72 = scmp.ne.s32.totalorder %s64, %s66
      %p73 = scmp.eq.s32.totalorder %s21, 1
      %p74 = por %p72, %p73
      %p75 = scmp.ne.s32.totalorder %s66, %s67
      %p76 = scmp.eq.s32.totalorder %s21, 0
      %p77 = por %p75, %p76
      %p78 = scmp.ne.s32.totalorder %s66, %s67
      %p79 = scmp.eq.s32.totalorder %s22, 1
      %p80 = por %p78, %p79
      %p82 = scmp.ne.s32.totalorder %s67, %s81
      %p83 = scmp.eq.s32.totalorder %s22, 0
      %p84 = por %p82, %p83
      %s86 = sadd.s32 %s85, 1
      %p89 = scmp.eq.s32.totalorder %s16, 1
      %p90 = scmp.ne.s32.totalorder %s85, %s87
      %p91 = scmp.eq.s32.totalorder %s16, 0
      %p92 = por %p90, %p91
      %p93 = scmp.ne.s32.totalorder %s85, %s87
      %p94 = scmp.eq.s32.totalorder %s21, 1
      %p95 = por %p93, %p94
      %p96 = scmp.ne.s32.totalorder %s87, %s88
      %p97 = scmp.eq.s32.totalorder %s21, 0
      %p98 = por %p96, %p97
      %p99 = scmp.ne.s32.totalorder %s87, %s88
      %p100 = scmp.eq.s32.totalorder %s22, 1
      %p101 = por %p99, %p100
      %p103 = scmp.ne.s32.totalorder %s88, %s102
      %p104 = scmp.eq.s32.totalorder %s22, 0
      %p105 = por %p103, %p104
      %s106 = ssub.s32 %s23, %s35
      %s107 = ssub.s32 %s24, %s31
      %s108 = sor.u32 %s106, %s107
      %p109 = scmp.eq.s32.totalorder %s108, 0
      %s111 = sadd.s32 %s110, 1
      %s112 = scalar_select %p109, %s110, %s111
      %p115 = pneg %p109
      %p116 = scmp.eq.s32.totalorder %s16, 1
      %p117 = por %p115, %p116
      %p118 = scmp.ne.s32.totalorder %s110, %s113
      %p119 = scmp.eq.s32.totalorder %s16, 0
      %p120 = por %p118, %p119
      %p121 = scmp.ne.s32.totalorder %s110, %s113
      %p122 = scmp.eq.s32.totalorder %s21, 1
      %p123 = por %p121, %p122
      %p124 = scmp.ne.s32.totalorder %s113, %s114
      %p125 = scmp.eq.s32.totalorder %s21, 0
      %p126 = por %p124, %p125
      %p127 = scmp.ne.s32.totalorder %s113, %s114
      %p128 = scmp.eq.s32.totalorder %s22, 1
      %p129 = por %p127, %p128
      %p131 = scmp.ne.s32.totalorder %s114, %s130
      %p132 = scmp.eq.s32.totalorder %s22, 0
      %p133 = por %p131, %p132
      %p134 = scmp.le.s32.totalorder 1, %s16
      %p135 = scmp.lt.s32.totalorder %s16, 3
      %p136 = pnand %p134, %p135
      %p137 = pneg %p136
      // Predicated region
      $region9: #{tpu_custom_call.1} parent=5 // pred_check
        _
      $region10: #{tpu_custom_call.1} parent=5 // pred_check_branch
        %139 = sbr.rel (%p136) target = $region12
      $region11: #{tpu_custom_call.1} parent=5 // pred_region
        %s140 = ssub.s32 %s16, 1
        // Predicated region
        $region13: #{tpu_custom_call.1} parent=11 // pred_check
          %p141 = pneg %p77
        $region14: #{tpu_custom_call.1} parent=11 // pred_check_branch
          %143 = sbr.rel (%p141) target = $region16
        $region15: #{tpu_custom_call.1} parent=11 // pred_region
          %s145 = ssub.s32 384, 384
          %146 = vsyncadd [#allocation6], %s145
          %s147 = sshll.u32 [#allocation5], 4
          %s148 = int_to_ptr.vmem [resolvable:$true] %s147
          %153 = dma.hbm_to_vmem [thread:$0]  %s1, 384, %s148, [#allocation6], 128, 128, 8
        $region16: #{tpu_custom_call.1} parent=11 // pred_fallthru
          _
        // Predicated region
        $region17: #{tpu_custom_call.1} parent=11 // pred_check
          %p154 = pneg %p98
        $region18: #{tpu_custom_call.1} parent=11 // pred_check_branch
          %156 = sbr.rel (%p154) target = $region20
        $region19: #{tpu_custom_call.1} parent=11 // pred_region
          _
        $region20: #{tpu_custom_call.1} parent=11 // pred_fallthru
          _
      $region12: #{tpu_custom_call.1} parent=5 // pred_fallthru
        _
      %p157 = scmp.lt.s32.totalorder %s16, 2
      // Predicated region
      $region21: #{tpu_custom_call.1} parent=5 // pred_check
        %p158 = pneg %p157
      $region22: #{tpu_custom_call.1} parent=5 // pred_check_branch
        %160 = sbr.rel (%p158) target = $region24
      $region23: #{tpu_custom_call.1} parent=5 // pred_region
        // Predicated region
        $region25: #{tpu_custom_call.1} parent=23 // pred_check
          %p161 = pneg %p50
        $region26: #{tpu_custom_call.1} parent=23 // pred_check_branch
          %163 = sbr.rel (%p161) target = $region28
        $region27: #{tpu_custom_call.1} parent=23 // pred_region
          %s164 = sand.u32 %s40, 1
          %s165 = scalar_lea.sflag [#allocation3], %s164
          %s166 = sand.u32 %s40, 1
          %s167 = smul.addr %s166, 24
          %s168 = scalar_lea.vmem [#allocation2], %s167
          %s170 = ssub.s32 384, 384
          %171 = vsyncadd %s165, %s170
          %s172 = smul.addr %s24, 3
          %s173 = smul.addr %s23, 3
          %s174 = sadd.s32 %s172, %s173
          %s175 = smul.addr %s174, 128
          %s176 = scalar_lea.hbm %s0, %s175
          %s178 = sshll.u32 %s168, 4
          %s179 = int_to_ptr.vmem [resolvable:$true] %s178
          %181 = dma.hbm_to_vmem [thread:$0]  %s176, 384, %s179, %s165
        $region28: #{tpu_custom_call.1} parent=23 // pred_fallthru
          _
      $region24: #{tpu_custom_call.1} parent=5 // pred_fallthru
        _
      %p182 = scmp.le.s32.totalorder 1, %s16
      %p183 = scmp.lt.s32.totalorder %s16, 3
      %p184 = pnand %p182, %p183
      %p185 = pneg %p184
      // Predicated region
      $region29: #{tpu_custom_call.1} parent=5 // pred_check
        _
      $region30: #{tpu_custom_call.1} parent=5 // pred_check_branch
        %187 = sbr.rel (%p184) target = $region32
      $region31: #{tpu_custom_call.1} parent=5 // pred_region
        %s188 = ssub.s32 %s16, 1
        %s189 = sand.u32 %s43, 1
        %s190 = scalar_lea.sflag [#allocation3], %s189
        %s191 = sand.u32 %s43, 1
        %s192 = smul.addr %s191, 24
        %s193 = scalar_lea.vmem [#allocation2], %s192
        // Predicated region
        $region33: #{tpu_custom_call.1} parent=31 // pred_check
          %p194 = pneg %p56
        $region34: #{tpu_custom_call.1} parent=31 // pred_check_branch
          %196 = sbr.rel (%p194) target = $region36
        $region35: #{tpu_custom_call.1} parent=31 // pred_region
          %197 = dma.done %s190, 384
        $region36: #{tpu_custom_call.1} parent=31 // pred_fallthru
          _
        // Predicated region
        $region37: #{tpu_custom_call.1} parent=31 // pred_check
          %p198 = pneg %p77
        $region38: #{tpu_custom_call.1} parent=31 // pred_check_branch
          %200 = sbr.rel (%p198) target = $region40
        $region39: #{tpu_custom_call.1} parent=31 // pred_region
          %201 = dma.done [#allocation6], 384
        $region40: #{tpu_custom_call.1} parent=31 // pred_fallthru
          _
        %s202 = sand.u32 %s43, 1
        %s203 = scalar_lea.sflag [#allocation3], %s202
        %s204 = sand.u32 %s43, 1
        %s205 = smul.addr %s204, 24
        %s206 = scalar_lea.vmem [#allocation2], %s205
        %p207 = pneg %p56
        %p208 = pneg %p53
        %p209 = pneg %p77
        %p210 = pneg %p74
        %p211 = pneg %p98
        %p212 = pneg %p95
        %p213 = pneg %p126
        %p214 = pneg %p123
        %s215 = sand.u32 %s113, 1
        %s216 = scalar_lea.sflag [#allocation4], %s215
        %s217 = sand.u32 %s113, 1
        %s218 = smul.addr %s217, 16
        %s219 = scalar_lea.vmem [#allocation7], %s218
        %s220 = smul.u32 2, %s26
        %v221 = vld [vmem:[%s193] sm:$0xff]
        %v222 = vld [vmem:[%s193 + $0x8] sm:$0xff]
        %v223 = vld [vmem:[%s193 + $0x10] sm:$0xff]
        %227 = vrot.lane.b32.xlu0 %v221, 127
        %v228 = vpop.permute.xlu0 %227
        %229 = vrot.lane.b32.xlu0 %v222, 127
        %v230 = vpop.permute.xlu0 %229
        %231 = vrot.lane.b32.xlu0 %v223, 127
        %v232 = vpop.permute.xlu0 %231
        %vm233 = vcmask 1039360
        %v234 = vsel %vm233, %v228, %v230
        %v235 = vsel %vm233, %v230, %v232
        %239 = vrot.lane.b32.xlu0 %v221, 126
        %v240 = vpop.permute.xlu0 %239
        %241 = vrot.lane.b32.xlu0 %v222, 126
        %v242 = vpop.permute.xlu0 %241
        %243 = vrot.lane.b32.xlu0 %v223, 126
        %v244 = vpop.permute.xlu0 %243
        %vm245 = vcmask 1031168
        %v246 = vsel %vm245, %v240, %v242
        %v247 = vsel %vm245, %v242, %v244
        %v251 = vld [vmem:[#allocation5] sm:$0xff]
        %s252 = scalar_lea.vmem [#allocation5], 8
        %v253 = vld [vmem:[%s252] sm:$0xff]
        %254 = vrot.lane.b32.xlu0 %v221, 110
        %v255 = vpop.permute.xlu0 %254
        %256 = vrot.lane.b32.xlu0 %v222, 110
        %v257 = vpop.permute.xlu0 %256
        %258 = vrot.lane.b32.xlu0 %v223, 110
        %v259 = vpop.permute.xlu0 %258
        %260 = vrot.lane.b32.xlu0 %v234, 110
        %v261 = vpop.permute.xlu0 %260
        %262 = vrot.lane.b32.xlu0 %v235, 110
        %v263 = vpop.permute.xlu0 %262
        %264 = vrot.lane.b32.xlu0 %v232, 110
        %v265 = vpop.permute.xlu0 %264
        %266 = vrot.lane.b32.xlu0 %v246, 110
        %v267 = vpop.permute.xlu0 %266
        %268 = vrot.lane.b32.xlu0 %v247, 110
        %v269 = vpop.permute.xlu0 %268
        %270 = vrot.lane.b32.xlu0 %v244, 110
        %v271 = vpop.permute.xlu0 %270
        %vm272 = vcmask 900096
        %v273 = vsel %vm272, %v255, %v257
        %v274 = vsel %vm272, %v257, %v259
        %v275 = vsel %vm272, %v261, %v263
        %v276 = vsel %vm272, %v263, %v265
        %v277 = vsel %vm272, %v267, %v269
        %v278 = vsel %vm272, %v269, %v271
        %vm288 = vcmask 195584
        %v290 = vsel %vm288, %v253, 0
        %292 = vmatprep.subr.mxu0 %v274
        %293 = vmatpush1.msra.mxu0 %v273
        %294 = vmatprep.subr.mxu0 %v276
        %295 = vmatpush1.msra.mxu0 %v275
        %296 = vmatprep.subr.mxu0 %v278
        %297 = vmatpush1.msra.mxu0 %v277
        %298 = vmatprep.subr.mxu0 0.0
        %299 = vmatpush1.msra.mxu0 0.0
        %300 = vmatprep.subr.mxu0 0.0
        %301 = vmatpush1.msra.mxu0 0.0
        %302 = vmatprep.subr.mxu0 0.0
        %303 = vmatpush1.msra.mxu0 0.0
        %304 = vmatprep.subr.mxu0 0.0
        %305 = vmatpush1.msra.mxu0 0.0
        %306 = vmatprep.subr.mxu0 0.0
        %307 = vmatpush1.msra.mxu0 0.0
        %308 = vmatprep.subr.mxu0 0.0
        %309 = vmatpush1.msra.mxu0 0.0
        %310 = vmatprep.subr.mxu0 0.0
        %311 = vmatpush1.msra.mxu0 0.0
        %312 = vmatprep.subr.mxu0 0.0
        %313 = vmatpush1.msra.mxu0 0.0
        %314 = vmatprep.subr.mxu0 0.0
        %315 = vmatpush1.msra.mxu0 0.0
        %316 = vmatprep.subr.mxu0 0.0
        %317 = vmatpush1.msra.mxu0 0.0
        %318 = vmatprep.subr.mxu0 0.0
        %319 = vmatpush1.msra.mxu0 0.0
        %320 = vmatprep.subr.mxu0 0.0
        %321 = vmatpush1.msra.mxu0 0.0
        %322 = vmatprep.subr.mxu0 0.0
        %323 = vmatpush1.msra.mxu0 0.0
        %324 = vmatprep.subr.mxu0 0.0
        %325 = vmatpush1.msra.mxu0 0.0
        %326 = vmatprep.subr.mxu0 0.0
        %327 = vmatpush1.msra.mxu0 0.0
        %328 = vmatprep.subr.mxu0 0.0
        %329 = vmatpush1.msra.mxu0 0.0
        %330 = vmatprep.subr.mxu0 0.0
        %331 = vmatpush1.msra.mxu0 0.0
        %332 = vmatprep.subr.mxu0 0.0
        %333 = vmatpush1.msra.mxu0 0.0
        %334 = vmatprep.subr.mxu0 0.0
        %335 = vmatpush1.msra.mxu0 0.0
        %336 = vmatprep.subr.mxu0 0.0
        %337 = vmatpush1.msra.mxu0 0.0
        %338 = vmatprep.subr.mxu0 0.0
        %339 = vmatpush1.msra.mxu0 0.0
        %340 = vmatprep.subr.mxu0 0.0
        %341 = vmatpush1.msra.mxu0 0.0
        %342 = vmatprep.subr.mxu0 0.0
        %343 = vmatpush1.msra.mxu0 0.0
        %344 = vmatprep.subr.mxu0 0.0
        %345 = vmatpush1.msra.mxu0 0.0
        %346 = vmatprep.subr.mxu0 0.0
        %347 = vmatpush1.msra.mxu0 0.0
        %348 = vmatprep.subr.mxu0 0.0
        %349 = vmatpush1.msra.mxu0 0.0
        %350 = vmatprep.subr.mxu0 0.0
        %351 = vmatpush1.msra.mxu0 0.0
        %352 = vmatprep.subr.mxu0 0.0
        %353 = vmatpush1.msra.mxu0 0.0
        %354 = vmatprep.subr.mxu0 0.0
        %355 = vmatpush1.msra.mxu0 0.0
        %356 = vmatprep.mubr.f32.mxu0 0.0
        %357 = vmatmul.mubr.f32.gmra.mrb[0].mxu0 %v290
        %v358 = vpop.f32.mrb[0].mxu0
        %v359 = vadd.f32 0.0, %v358
        %v360 = vpop.f32.mrb[0].mxu0
        %v361 = vadd.f32 0.0, %v360
        %362 = vdwg.mxu0
        %363 = vmatprep.subr.mxu0 0.0
        %364 = vmatpush1.msra.mxu0 %v259
        %365 = vmatprep.subr.mxu0 0.0
        %366 = vmatpush1.msra.mxu0 %v265
        %367 = vmatprep.subr.mxu0 0.0
        %368 = vmatpush1.msra.mxu0 %v271
        %369 = vmatprep.subr.mxu0 0.0
        %370 = vmatpush1.msra.mxu0 0.0
        %371 = vmatprep.subr.mxu0 0.0
        %372 = vmatpush1.msra.mxu0 0.0
        %373 = vmatprep.subr.mxu0 0.0
        %374 = vmatpush1.msra.mxu0 0.0
        %375 = vmatprep.subr.mxu0 0.0
        %376 = vmatpush1.msra.mxu0 0.0
        %377 = vmatprep.subr.mxu0 0.0
        %378 = vmatpush1.msra.mxu0 0.0
        %379 = vmatprep.subr.mxu0 0.0
        %380 = vmatpush1.msra.mxu0 0.0
        %381 = vmatprep.subr.mxu0 0.0
        %382 = vmatpush1.msra.mxu0 0.0
        %383 = vmatprep.subr.mxu0 0.0
        %384 = vmatpush1.msra.mxu0 0.0
        %385 = vmatprep.subr.mxu0 0.0
        %386 = vmatpush1.msra.mxu0 0.0
        %387 = vmatprep.subr.mxu0 0.0
        %388 = vmatpush1.msra.mxu0 0.0
        %389 = vmatprep.subr.mxu0 0.0
        %390 = vmatpush1.msra.mxu0 0.0
        %391 = vmatprep.subr.mxu0 0.0
        %392 = vmatpush1.msra.mxu0 0.0
        %393 = vmatprep.subr.mxu0 0.0
        %394 = vmatpush1.msra.mxu0 0.0
        %395 = vmatprep.subr.mxu0 0.0
        %396 = vmatpush1.msra.mxu0 0.0
        %397 = vmatprep.subr.mxu0 0.0
        %398 = vmatpush1.msra.mxu0 0.0
        %399 = vmatprep.subr.mxu0 0.0
        %400 = vmatpush1.msra.mxu0 0.0
        %401 = vmatprep.subr.mxu0 0.0
        %402 = vmatpush1.msra.mxu0 0.0
        %403 = vmatprep.subr.mxu0 0.0
        %404 = vmatpush1.msra.mxu0 0.0
        %405 = vmatprep.subr.mxu0 0.0
        %406 = vmatpush1.msra.mxu0 0.0
        %407 = vmatprep.subr.mxu0 0.0
        %408 = vmatpush1.msra.mxu0 0.0
        %409 = vmatprep.subr.mxu0 0.0
        %410 = vmatpush1.msra.mxu0 0.0
        %411 = vmatprep.subr.mxu0 0.0
        %412 = vmatpush1.msra.mxu0 0.0
        %413 = vmatprep.subr.mxu0 0.0
        %414 = vmatpush1.msra.mxu0 0.0
        %415 = vmatprep.subr.mxu0 0.0
        %416 = vmatpush1.msra.mxu0 0.0
        %417 = vmatprep.subr.mxu0 0.0
        %418 = vmatpush1.msra.mxu0 0.0
        %419 = vmatprep.subr.mxu0 0.0
        %420 = vmatpush1.msra.mxu0 0.0
        %421 = vmatprep.subr.mxu0 0.0
        %422 = vmatpush1.msra.mxu0 0.0
        %423 = vmatprep.subr.mxu0 0.0
        %424 = vmatpush1.msra.mxu0 0.0
        %425 = vmatprep.subr.mxu0 0.0
        %426 = vmatpush1.msra.mxu0 0.0
        %427 = vmatprep.mubr.f32.mxu0 0.0
        %428 = vmatmul.mubr.f32.gmra.mrb[0].mxu0 %v290
        %v429 = vpop.f32.mrb[0].mxu0
        %v430 = vadd.f32 0.0, %v429
        %v431 = vpop.f32.mrb[0].mxu0
        %432 = vdwg.mxu0
        %v434 = vsel %vm288, %v251, 0
        %436 = vmatprep.subr.mxu0 %v222
        %437 = vmatpush1.msra.mxu0 %v221
        %438 = vmatprep.subr.mxu0 %v235
        %439 = vmatpush1.msra.mxu0 %v234
        %440 = vmatprep.subr.mxu0 %v247
        %441 = vmatpush1.msra.mxu0 %v246
        %442 = vmatprep.subr.mxu0 0.0
        %443 = vmatpush1.msra.mxu0 0.0
        %444 = vmatprep.subr.mxu0 0.0
        %445 = vmatpush1.msra.mxu0 0.0
        %446 = vmatprep.subr.mxu0 0.0
        %447 = vmatpush1.msra.mxu0 0.0
        %448 = vmatprep.subr.mxu0 0.0
        %449 = vmatpush1.msra.mxu0 0.0
        %450 = vmatprep.subr.mxu0 0.0
        %451 = vmatpush1.msra.mxu0 0.0
        %452 = vmatprep.subr.mxu0 0.0
        %453 = vmatpush1.msra.mxu0 0.0
        %454 = vmatprep.subr.mxu0 0.0
        %455 = vmatpush1.msra.mxu0 0.0
        %456 = vmatprep.subr.mxu0 0.0
        %457 = vmatpush1.msra.mxu0 0.0
        %458 = vmatprep.subr.mxu0 0.0
        %459 = vmatpush1.msra.mxu0 0.0
        %460 = vmatprep.subr.mxu0 0.0
        %461 = vmatpush1.msra.mxu0 0.0
        %462 = vmatprep.subr.mxu0 0.0
        %463 = vmatpush1.msra.mxu0 0.0
        %464 = vmatprep.subr.mxu0 0.0
        %465 = vmatpush1.msra.mxu0 0.0
        %466 = vmatprep.subr.mxu0 0.0
        %467 = vmatpush1.msra.mxu0 0.0
        %468 = vmatprep.subr.mxu0 0.0
        %469 = vmatpush1.msra.mxu0 0.0
        %470 = vmatprep.subr.mxu0 0.0
        %471 = vmatpush1.msra.mxu0 0.0
        %472 = vmatprep.subr.mxu0 0.0
        %473 = vmatpush1.msra.mxu0 0.0
        %474 = vmatprep.subr.mxu0 0.0
        %475 = vmatpush1.msra.mxu0 0.0
        %476 = vmatprep.subr.mxu0 0.0
        %477 = vmatpush1.msra.mxu0 0.0
        %478 = vmatprep.subr.mxu0 0.0
        %479 = vmatpush1.msra.mxu0 0.0
        %480 = vmatprep.subr.mxu0 0.0
        %481 = vmatpush1.msra.mxu0 0.0
        %482 = vmatprep.subr.mxu0 0.0
        %483 = vmatpush1.msra.mxu0 0.0
        %484 = vmatprep.subr.mxu0 0.0
        %485 = vmatpush1.msra.mxu0 0.0
        %486 = vmatprep.subr.mxu0 0.0
        %487 = vmatpush1.msra.mxu0 0.0
        %488 = vmatprep.subr.mxu0 0.0
        %489 = vmatpush1.msra.mxu0 0.0
        %490 = vmatprep.subr.mxu0 0.0
        %491 = vmatpush1.msra.mxu0 0.0
        %492 = vmatprep.subr.mxu0 0.0
        %493 = vmatpush1.msra.mxu0 0.0
        %494 = vmatprep.subr.mxu0 0.0
        %495 = vmatpush1.msra.mxu0 0.0
        %496 = vmatprep.subr.mxu0 0.0
        %497 = vmatpush1.msra.mxu0 0.0
        %498 = vmatprep.subr.mxu0 0.0
        %499 = vmatpush1.msra.mxu0 0.0
        %500 = vmatprep.mubr.f32.mxu0 0.0
        %501 = vmatmul.mubr.f32.gmra.mrb[0].mxu0 %v434
        %v502 = vpop.f32.mrb[0].mxu0
        %v503 = vadd.f32 %v359, %v502
        %v504 = vpop.f32.mrb[0].mxu0
        %v505 = vadd.f32 %v361, %v504
        %506 = vdwg.mxu0
        %507 = vmatprep.subr.mxu0 0.0
        %508 = vmatpush1.msra.mxu0 %v223
        %509 = vmatprep.subr.mxu0 0.0
        %510 = vmatpush1.msra.mxu0 %v232
        %511 = vmatprep.subr.mxu0 0.0
        %512 = vmatpush1.msra.mxu0 %v244
        %513 = vmatprep.subr.mxu0 0.0
        %514 = vmatpush1.msra.mxu0 0.0
        %515 = vmatprep.subr.mxu0 0.0
        %516 = vmatpush1.msra.mxu0 0.0
        %517 = vmatprep.subr.mxu0 0.0
        %518 = vmatpush1.msra.mxu0 0.0
        %519 = vmatprep.subr.mxu0 0.0
        %520 = vmatpush1.msra.mxu0 0.0
        %521 = vmatprep.subr.mxu0 0.0
        %522 = vmatpush1.msra.mxu0 0.0
        %523 = vmatprep.subr.mxu0 0.0
        %524 = vmatpush1.msra.mxu0 0.0
        %525 = vmatprep.subr.mxu0 0.0
        %526 = vmatpush1.msra.mxu0 0.0
        %527 = vmatprep.subr.mxu0 0.0
        %528 = vmatpush1.msra.mxu0 0.0
        %529 = vmatprep.subr.mxu0 0.0
        %530 = vmatpush1.msra.mxu0 0.0
        %531 = vmatprep.subr.mxu0 0.0
        %532 = vmatpush1.msra.mxu0 0.0
        %533 = vmatprep.subr.mxu0 0.0
        %534 = vmatpush1.msra.mxu0 0.0
        %535 = vmatprep.subr.mxu0 0.0
        %536 = vmatpush1.msra.mxu0 0.0
        %537 = vmatprep.subr.mxu0 0.0
        %538 = vmatpush1.msra.mxu0 0.0
        %539 = vmatprep.subr.mxu0 0.0
        %540 = vmatpush1.msra.mxu0 0.0
        %541 = vmatprep.subr.mxu0 0.0
        %542 = vmatpush1.msra.mxu0 0.0
        %543 = vmatprep.subr.mxu0 0.0
        %544 = vmatpush1.msra.mxu0 0.0
        %545 = vmatprep.subr.mxu0 0.0
        %546 = vmatpush1.msra.mxu0 0.0
        %547 = vmatprep.subr.mxu0 0.0
        %548 = vmatpush1.msra.mxu0 0.0
        %549 = vmatprep.subr.mxu0 0.0
        %550 = vmatpush1.msra.mxu0 0.0
        %551 = vmatprep.subr.mxu0 0.0
        %552 = vmatpush1.msra.mxu0 0.0
        %553 = vmatprep.subr.mxu0 0.0
        %554 = vmatpush1.msra.mxu0 0.0
        %555 = vmatprep.subr.mxu0 0.0
        %556 = vmatpush1.msra.mxu0 0.0
        %557 = vmatprep.subr.mxu0 0.0
        %558 = vmatpush1.msra.mxu0 0.0
        %559 = vmatprep.subr.mxu0 0.0
        %560 = vmatpush1.msra.mxu0 0.0
        %561 = vmatprep.subr.mxu0 0.0
        %562 = vmatpush1.msra.mxu0 0.0
        %563 = vmatprep.subr.mxu0 0.0
        %564 = vmatpush1.msra.mxu0 0.0
        %565 = vmatprep.subr.mxu0 0.0
        %566 = vmatpush1.msra.mxu0 0.0
        %567 = vmatprep.subr.mxu0 0.0
        %568 = vmatpush1.msra.mxu0 0.0
        %569 = vmatprep.subr.mxu0 0.0
        %570 = vmatpush1.msra.mxu0 0.0
        %571 = vmatprep.mubr.f32.mxu0 0.0
        %572 = vmatmul.mubr.f32.gmra.mrb[0].mxu0 %v434
        %v573 = vpop.f32.mrb[0].mxu0
        %v574 = vadd.f32 %v430, %v573
        %v575 = vpop.f32.mrb[0].mxu0
        %576 = vdwg.mxu0
        %s577 = scalar_lea.vmem [#allocation5], 16
        %v578 = vld [vmem:[%s577] sm:$0xff]
        %579 = vrot.lane.b32.xlu0 %v221, 92
        %v580 = vpop.permute.xlu0 %579
        %581 = vrot.lane.b32.xlu0 %v222, 92
        %v582 = vpop.permute.xlu0 %581
        %583 = vrot.lane.b32.xlu0 %v223, 92
        %v584 = vpop.permute.xlu0 %583
        %585 = vrot.lane.b32.xlu0 %v234, 92
        %v586 = vpop.permute.xlu0 %585
        %587 = vrot.lane.b32.xlu0 %v235, 92
        %v588 = vpop.permute.xlu0 %587
        %589 = vrot.lane.b32.xlu0 %v232, 92
        %v590 = vpop.permute.xlu0 %589
        %591 = vrot.lane.b32.xlu0 %v246, 92
        %v592 = vpop.permute.xlu0 %591
        %593 = vrot.lane.b32.xlu0 %v247, 92
        %v594 = vpop.permute.xlu0 %593
        %595 = vrot.lane.b32.xlu0 %v244, 92
        %v596 = vpop.permute.xlu0 %595
        %vm597 = vcmask 752640
        %v598 = vsel %vm597, %v580, %v582
        %v599 = vsel %vm597, %v582, %v584
        %v600 = vsel %vm597, %v586, %v588
        %v601 = vsel %vm597, %v588, %v590
        %v602 = vsel %vm597, %v592, %v594
        %v603 = vsel %vm597, %v594, %v596
        %v614 = vsel %vm288, %v578, 0
        %616 = vmatprep.subr.mxu0 %v599
        %617 = vmatpush1.msra.mxu0 %v598
        %618 = vmatprep.subr.mxu0 %v601
        %619 = vmatpush1.msra.mxu0 %v600
        %620 = vmatprep.subr.mxu0 %v603
        %621 = vmatpush1.msra.mxu0 %v602
        %622 = vmatprep.subr.mxu0 0.0
        %623 = vmatpush1.msra.mxu0 0.0
        %624 = vmatprep.subr.mxu0 0.0
        %625 = vmatpush1.msra.mxu0 0.0
        %626 = vmatprep.subr.mxu0 0.0
        %627 = vmatpush1.msra.mxu0 0.0
        %628 = vmatprep.subr.mxu0 0.0
        %629 = vmatpush1.msra.mxu0 0.0
        %630 = vmatprep.subr.mxu0 0.0
        %631 = vmatpush1.msra.mxu0 0.0
        %632 = vmatprep.subr.mxu0 0.0
        %633 = vmatpush1.msra.mxu0 0.0
        %634 = vmatprep.subr.mxu0 0.0
        %635 = vmatpush1.msra.mxu0 0.0
        %636 = vmatprep.subr.mxu0 0.0
        %637 = vmatpush1.msra.mxu0 0.0
        %638 = vmatprep.subr.mxu0 0.0
        %639 = vmatpush1.msra.mxu0 0.0
        %640 = vmatprep.subr.mxu0 0.0
        %641 = vmatpush1.msra.mxu0 0.0
        %642 = vmatprep.subr.mxu0 0.0
        %643 = vmatpush1.msra.mxu0 0.0
        %644 = vmatprep.subr.mxu0 0.0
        %645 = vmatpush1.msra.mxu0 0.0
        %646 = vmatprep.subr.mxu0 0.0
        %647 = vmatpush1.msra.mxu0 0.0
        %648 = vmatprep.subr.mxu0 0.0
        %649 = vmatpush1.msra.mxu0 0.0
        %650 = vmatprep.subr.mxu0 0.0
        %651 = vmatpush1.msra.mxu0 0.0
        %652 = vmatprep.subr.mxu0 0.0
        %653 = vmatpush1.msra.mxu0 0.0
        %654 = vmatprep.subr.mxu0 0.0
        %655 = vmatpush1.msra.mxu0 0.0
        %656 = vmatprep.subr.mxu0 0.0
        %657 = vmatpush1.msra.mxu0 0.0
        %658 = vmatprep.subr.mxu0 0.0
        %659 = vmatpush1.msra.mxu0 0.0
        %660 = vmatprep.subr.mxu0 0.0
        %661 = vmatpush1.msra.mxu0 0.0
        %662 = vmatprep.subr.mxu0 0.0
        %663 = vmatpush1.msra.mxu0 0.0
        %664 = vmatprep.subr.mxu0 0.0
        %665 = vmatpush1.msra.mxu0 0.0
        %666 = vmatprep.subr.mxu0 0.0
        %667 = vmatpush1.msra.mxu0 0.0
        %668 = vmatprep.subr.mxu0 0.0
        %669 = vmatpush1.msra.mxu0 0.0
        %670 = vmatprep.subr.mxu0 0.0
        %671 = vmatpush1.msra.mxu0 0.0
        %672 = vmatprep.subr.mxu0 0.0
        %673 = vmatpush1.msra.mxu0 0.0
        %674 = vmatprep.subr.mxu0 0.0
        %675 = vmatpush1.msra.mxu0 0.0
        %676 = vmatprep.subr.mxu0 0.0
        %677 = vmatpush1.msra.mxu0 0.0
        %678 = vmatprep.subr.mxu0 0.0
        %679 = vmatpush1.msra.mxu0 0.0
        %680 = vmatprep.mubr.f32.mxu0 0.0
        %681 = vmatmul.mubr.f32.gmra.mrb[0].mxu0 %v614
        %v682 = vpop.f32.mrb[0].mxu0
        %v683 = vadd.f32 0.0, %v682
        %v684 = vpop.f32.mrb[0].mxu0
        %v685 = vadd.f32 0.0, %v684
        %686 = vdwg.mxu0
        %687 = vmatprep.subr.mxu0 0.0
        %688 = vmatpush1.msra.mxu0 %v584
        %689 = vmatprep.subr.mxu0 0.0
        %690 = vmatpush1.msra.mxu0 %v590
        %691 = vmatprep.subr.mxu0 0.0
        %692 = vmatpush1.msra.mxu0 %v596
        %693 = vmatprep.subr.mxu0 0.0
        %694 = vmatpush1.msra.mxu0 0.0
        %695 = vmatprep.subr.mxu0 0.0
        %696 = vmatpush1.msra.mxu0 0.0
        %697 = vmatprep.subr.mxu0 0.0
        %698 = vmatpush1.msra.mxu0 0.0
        %699 = vmatprep.subr.mxu0 0.0
        %700 = vmatpush1.msra.mxu0 0.0
        %701 = vmatprep.subr.mxu0 0.0
        %702 = vmatpush1.msra.mxu0 0.0
        %703 = vmatprep.subr.mxu0 0.0
        %704 = vmatpush1.msra.mxu0 0.0
        %705 = vmatprep.subr.mxu0 0.0
        %706 = vmatpush1.msra.mxu0 0.0
        %707 = vmatprep.subr.mxu0 0.0
        %708 = vmatpush1.msra.mxu0 0.0
        %709 = vmatprep.subr.mxu0 0.0
        %710 = vmatpush1.msra.mxu0 0.0
        %711 = vmatprep.subr.mxu0 0.0
        %712 = vmatpush1.msra.mxu0 0.0
        %713 = vmatprep.subr.mxu0 0.0
        %714 = vmatpush1.msra.mxu0 0.0
        %715 = vmatprep.subr.mxu0 0.0
        %716 = vmatpush1.msra.mxu0 0.0
        %717 = vmatprep.subr.mxu0 0.0
        %718 = vmatpush1.msra.mxu0 0.0
        %719 = vmatprep.subr.mxu0 0.0
        %720 = vmatpush1.msra.mxu0 0.0
        %721 = vmatprep.subr.mxu0 0.0
        %722 = vmatpush1.msra.mxu0 0.0
        %723 = vmatprep.subr.mxu0 0.0
        %724 = vmatpush1.msra.mxu0 0.0
        %725 = vmatprep.subr.mxu0 0.0
        %726 = vmatpush1.msra.mxu0 0.0
        %727 = vmatprep.subr.mxu0 0.0
        %728 = vmatpush1.msra.mxu0 0.0
        %729 = vmatprep.subr.mxu0 0.0
        %730 = vmatpush1.msra.mxu0 0.0
        %731 = vmatprep.subr.mxu0 0.0
        %732 = vmatpush1.msra.mxu0 0.0
        %733 = vmatprep.subr.mxu0 0.0
        %734 = vmatpush1.msra.mxu0 0.0
        %735 = vmatprep.subr.mxu0 0.0
        %736 = vmatpush1.msra.mxu0 0.0
        %737 = vmatprep.subr.mxu0 0.0
        %738 = vmatpush1.msra.mxu0 0.0
        %739 = vmatprep.subr.mxu0 0.0
        %740 = vmatpush1.msra.mxu0 0.0
        %741 = vmatprep.subr.mxu0 0.0
        %742 = vmatpush1.msra.mxu0 0.0
        %743 = vmatprep.subr.mxu0 0.0
        %744 = vmatpush1.msra.mxu0 0.0
        %745 = vmatprep.subr.mxu0 0.0
        %746 = vmatpush1.msra.mxu0 0.0
        %747 = vmatprep.subr.mxu0 0.0
        %748 = vmatpush1.msra.mxu0 0.0
        %749 = vmatprep.subr.mxu0 0.0
        %750 = vmatpush1.msra.mxu0 0.0
        %751 = vmatprep.mubr.f32.mxu0 0.0
        %752 = vmatmul.mubr.f32.gmra.mrb[0].mxu0 %v614
        %v753 = vpop.f32.mrb[0].mxu0
        %v754 = vadd.f32 0.0, %v753
        %v755 = vpop.f32.mrb[0].mxu0
        %756 = vdwg.mxu0
        %v757 = vadd.f32 %v503, %v683
        %v758 = vadd.f32 %v505, %v685
        %v759 = vadd.f32 %v574, %v754
        %v760 = vld [vmem:[%s2] sm:$0xff]
        %762 = vset.pattern.permute.xlu0 0
        %763 = vperm.xlu0 %762, %v760
        %v764 = vpop.permute.xlu0 %763
        %v766 = vadd.f32 %v757, %v764
        %v767 = vadd.f32 %v758, %v764
        %v768 = vadd.f32 %v759, %v764
        %v769 = vmax.f32 %v766, 0.0
        %v770 = vmax.f32 %v767, 0.0
        %v771 = vmax.f32 %v768, 0.0
        %773 = vrot.lane.b32.xlu0 %v769, 126
        %v774 = vpop.permute.xlu0 %773
        %776 = vrot.lane.b32.xlu0 %v769, 124
        %v777 = vpop.permute.xlu0 %776
        %779 = vrot.lane.b32.xlu0 %v769, 122
        %v780 = vpop.permute.xlu0 %779
        %782 = vrot.lane.b32.xlu0 %v769, 120
        %v783 = vpop.permute.xlu0 %782
        %785 = vrot.lane.b32.xlu0 %v769, 118
        %v786 = vpop.permute.xlu0 %785
        %788 = vrot.lane.b32.xlu0 %v769, 116
        %v789 = vpop.permute.xlu0 %788
        %792 = vrot.lane.b32.xlu0 %v769, 114
        %v793 = vpop.permute.xlu0 %792
        %794 = vrot.lane.b32.xlu0 %v770, 114
        %v795 = vpop.permute.xlu0 %794
        %vm796 = vcmask 932864
        %v797 = vsel %vm796, %v793, %v795
        %799 = vrot.lane.b32.xlu0 %v770, 112
        %v800 = vpop.permute.xlu0 %799
        %802 = vrot.lane.b32.xlu0 %v770, 110
        %v803 = vpop.permute.xlu0 %802
        %805 = vrot.lane.b32.xlu0 %v770, 108
        %v806 = vpop.permute.xlu0 %805
        %808 = vrot.lane.b32.xlu0 %v770, 106
        %v809 = vpop.permute.xlu0 %808
        %811 = vrot.lane.b32.xlu0 %v770, 104
        %v812 = vpop.permute.xlu0 %811
        %814 = vrot.lane.b32.xlu0 %v770, 102
        %v815 = vpop.permute.xlu0 %814
        %818 = vrot.lane.b32.xlu0 %v770, 100
        %v819 = vpop.permute.xlu0 %818
        %820 = vrot.lane.b32.xlu0 %v771, 100
        %v821 = vpop.permute.xlu0 %820
        %vm822 = vcmask 818176
        %v823 = vsel %vm822, %v819, %v821
        %825 = vrot.lane.b32.xlu0 %v771, 98
        %v826 = vpop.permute.xlu0 %825
        %vm828 = vcmask 130048
        %v829 = vsel %vm828, %v769, %v774
        %vm830 = vcmask 261120
        %v831 = vsel %vm830, %v829, %v777
        %vm832 = vcmask 392192
        %v833 = vsel %vm832, %v831, %v780
        %vm834 = vcmask 523264
        %v835 = vsel %vm834, %v833, %v783
        %vm836 = vcmask 654336
        %v837 = vsel %vm836, %v835, %v786
        %vm838 = vcmask 785408
        %v839 = vsel %vm838, %v837, %v789
        %vm840 = vcmask 916480
        %v841 = vsel %vm840, %v839, %v797
        %v842 = vsel %vm828, %v800, %v803
        %v843 = vsel %vm830, %v842, %v806
        %v844 = vsel %vm832, %v843, %v809
        %v845 = vsel %vm834, %v844, %v812
        %v846 = vsel %vm836, %v845, %v815
        %v847 = vsel %vm838, %v846, %v823
        %v848 = vsel %vm840, %v847, %v826
        %849 = vst [vmem:[%s219] sm:$0xff] %v841
        %850 = vst [vmem:[%s219 + $0x8] sm:$0xff] %v848
        %s851 = sand.u32 %s113, 1
        %s852 = scalar_lea.sflag [#allocation4], %s851
        %s853 = sand.u32 %s113, 1
        %s854 = smul.addr %s853, 16
        %s855 = scalar_lea.vmem [#allocation7], %s854
        // Predicated region
        $region41: #{tpu_custom_call.1} parent=31 // pred_check
          %p856 = pneg %p123
        $region42: #{tpu_custom_call.1} parent=31 // pred_check_branch
          %858 = sbr.rel (%p856) target = $region44
        $region43: #{tpu_custom_call.1} parent=31 // pred_region
          %s859 = smul.u32 2, %s26
          %s861 = ssub.s32 256, 256
          %862 = vsyncadd %s852, %s861
          %s863 = smul.addr %s25, 2
          %s864 = sadd.s32 %s859, %s863
          %s865 = smul.addr %s864, 128
          %s866 = scalar_lea.hbm %s3, %s865
          %s868 = sshll.u32 %s855, 4
          %s869 = int_to_ptr.vmem [resolvable:$true] %s868
          %871 = dma.vmem_to_hbm [thread:$0]  %s869, 256, %s866, %s852
        $region44: #{tpu_custom_call.1} parent=31 // pred_fallthru
          _
      $region32: #{tpu_custom_call.1} parent=5 // pred_fallthru
        _
      %p872 = scmp.le.s32.totalorder 2, %s16
      // Predicated region
      $region45: #{tpu_custom_call.1} parent=5 // pred_check
        %p873 = pneg %p872
      $region46: #{tpu_custom_call.1} parent=5 // pred_check_branch
        %875 = sbr.rel (%p873) target = $region48
      $region47: #{tpu_custom_call.1} parent=5 // pred_region
        %s876 = ssub.s32 %s16, 2
        // Predicated region
        $region49: #{tpu_custom_call.1} parent=47 // pred_check
          %p877 = pneg %p129
        $region50: #{tpu_custom_call.1} parent=47 // pred_check_branch
          %879 = sbr.rel (%p877) target = $region52
        $region51: #{tpu_custom_call.1} parent=47 // pred_region
          %s880 = sand.u32 %s114, 1
          %s881 = scalar_lea.sflag [#allocation4], %s880
          %s882 = sand.u32 %s114, 1
          %s883 = smul.addr %s882, 16
          %s884 = scalar_lea.vmem [#allocation7], %s883
          %885 = dma.done %s881, 256
        $region52: #{tpu_custom_call.1} parent=47 // pred_fallthru
          _
      $region48: #{tpu_custom_call.1} parent=5 // pred_fallthru
        _
    $region6: #{tpu_custom_call.1} parent=1 // loop_footer
      %s20 = sadd.s32 1, %s16
    $region7: #{tpu_custom_call.1} parent=1 // loop_footer_branch
      %15 = sbr.rel target = $region3
    $region8: #{tpu_custom_call.1} parent=1 // loop_exit
      _
    %886 = vsyncpa [#allocation3], 1
    %s887 = scalar_lea.sflag [#allocation3], 1
    %888 = vsyncpa %s887, 1
    %889 = vsyncpa [#allocation6], 1
    %890 = vsyncpa [#allocation4], 1
    %s891 = scalar_lea.sflag [#allocation4], 1
    %892 = vsyncpa %s891, 1

</llo_original>
